<compile_context>
chip_gen: v7x
topology: tpu7x:2x2x1
jax: 0.10.0
libtpu: 0.0.40
codegen_flags: <defaults>
</compile_context>

<pallas_src>
import functools

import jax
import jax.numpy as jnp
from jax.experimental import pallas as pl
from jax.experimental.pallas import tpu as pltpu


def _round_up(a, m):
    return ((a + m - 1) // m) * m


def _filter_kernel(x_ref, w_ref, b_ref, o_ref, *, kernel_size, seq_len):
    # x_ref : (TR, L_al)  rows = flattened (batch, channel); valid time = [0, seq_len)
    # w_ref : (TR, K)     per-row depthwise filter taps
    # b_ref : (TR, 1)     per-row bias
    # o_ref : (TR, L_al)  output (tail beyond seq_len is don't-care)
    x = x_ref[...].astype(jnp.float32)
    w = w_ref[...].astype(jnp.float32)
    b = b_ref[...].astype(jnp.float32)
    tr, l_al = x.shape
    pad = kernel_size // 2

    # Hoisted broadcasts / iota (JAX does not CSE broadcast_in_dim).
    t_idx = jax.lax.broadcasted_iota(jnp.int32, (tr, l_al), dimension=1)
    x_first = jnp.broadcast_to(x[:, 0:1], (tr, l_al))                   # replicate left edge
    x_last = jnp.broadcast_to(x[:, seq_len - 1:seq_len], (tr, l_al))    # replicate right edge

    # Accumulator starts at the bias -> saves one full VPU add pass.
    acc = jnp.broadcast_to(b, (tr, l_al))

    # Unrolled tap loop.  out[t] += w[k] * x[clamp(t + k - pad, 0, seq_len-1)].
    # The circular roll puts x[(t + d) mod L_al] at lane t; lanes whose source
    # fell off an edge (or into the alignment tail) are replaced with the
    # replicated edge value, matching Conv1d padding_mode='replicate'.
    for k in range(kernel_size):
        d = k - pad
        if d == 0:
            shifted = x
        else:
            shifted = pltpu.roll(x, shift=(-d) % l_al, axis=1)
            if d < 0:
                shifted = jnp.where(t_idx < -d, x_first, shifted)
            else:
                shifted = jnp.where(t_idx >= seq_len - d, x_last, shifted)
        acc = acc + w[:, k:k + 1] * shifted

    o_ref[...] = acc.astype(o_ref.dtype)


@functools.partial(jax.jit, static_argnames=("kernel_size",))
def filter_forward(x_blc, weight_ck, bias_c, kernel_size):
    """Equivalent of Filter.forward on a (B, L, C) input."""
    # TODO(synk): even kernel_size would need PyTorch's asymmetric output-length
    # semantics; this implementation assumes odd kernel_size ("same" conv).
    assert kernel_size % 2 == 1, "kernel_size must be odd"
    B, L, C = x_blc.shape
    rows = B * C

    # Lane-dense time extent and sublane-dense row tiling.
    # TODO(synk): for very long sequences the time axis should also be tiled
    # (with halo handling); one lane-aligned block is fine at these sizes.
    L_al = _round_up(L, 128)
    TR = min(256, _round_up(rows, 8))     # row tile (multiple of 8 sublanes)
    R_pad = _round_up(rows, TR)

    # --- plain-JAX glue (fused under jit): transpose + flatten (B, C) rows ---
    x_rows = jnp.transpose(x_blc, (0, 2, 1)).reshape(rows, L)        # (B*C, L)
    x_rt = jnp.pad(x_rows, ((0, R_pad - rows), (0, L_al - L)))       # align; pad values unused

    # Per-row (batch*channel) weight / bias: row = b*C + c -> repeat over batch.
    w_rows = jnp.tile(weight_ck, (B, 1))                             # (B*C, K)
    w_rt = jnp.pad(w_rows, ((0, R_pad - rows), (0, 0)))
    b_rows = jnp.tile(bias_c, (B,)).reshape(rows, 1)                 # (B*C, 1)
    b_rt = jnp.pad(b_rows, ((0, R_pad - rows), (0, 0)))

    kernel = functools.partial(_filter_kernel,
                               kernel_size=kernel_size, seq_len=L)

    out_rt = pl.pallas_call(
        kernel,
        out_shape=jax.ShapeDtypeStruct((R_pad, L_al), x_blc.dtype),
        grid_spec=pltpu.PrefetchScalarGridSpec(
            num_scalar_prefetch=0,
            grid=(R_pad // TR,),
            in_specs=[
                pl.BlockSpec((TR, L_al), lambda r: (r, 0)),
                pl.BlockSpec((TR, kernel_size), lambda r: (r, 0)),
                pl.BlockSpec((TR, 1), lambda r: (r, 0)),
            ],
            out_specs=pl.BlockSpec((TR, L_al), lambda r: (r, 0)),
        ),
        compiler_params=pltpu.CompilerParams(
            dimension_semantics=("parallel",)),
    )(x_rt, w_rt, b_rt)

    # Strip alignment padding and restore (B, L, C).
    out = out_rt[:rows, :L].reshape(B, C, L)
    return jnp.transpose(out, (0, 2, 1))


def _reference_forward(x_blc, weight_ck, bias_c, kernel_size):
    """Pure-JAX reference of the same depthwise replicate-padded conv."""
    B, L, C = x_blc.shape
    pad = kernel_size // 2
    x_bcl = jnp.transpose(x_blc, (0, 2, 1))
    x_pad = jnp.concatenate(
        [jnp.repeat(x_bcl[:, :, :1], pad, axis=2),
         x_bcl,
         jnp.repeat(x_bcl[:, :, -1:], pad, axis=2)], axis=2)
    out = jnp.zeros((B, C, L), jnp.float32)
    for k in range(kernel_size):
        out = out + weight_ck[None, :, k:k + 1] * x_pad[:, :, k:k + L]
    out = out + bias_c[None, :, None]
    return jnp.transpose(out, (0, 2, 1)).astype(x_blc.dtype)


if __name__ == "__main__":
    # Module config (matches Filter(channel=4, kernel_size=25))
    channel = 4
    kernel_size = 25
    B, L = 2, 16

    key = jax.random.PRNGKey(0)
    k_x, k_b = jax.random.split(key)

    # Parameters, initialized deterministically in-script:
    #   weight = 1/kernel_size * ones([channel, 1, kernel_size])  (as in __init__)
    #   bias   = Conv1d-default uniform(-sqrt(1/K), sqrt(1/K))
    weight = (1.0 / kernel_size) * jnp.ones((channel, kernel_size), jnp.float32)
    bound = (1.0 / kernel_size) ** 0.5
    bias = jax.random.uniform(k_b, (channel,), jnp.float32,
                              minval=-bound, maxval=bound)

    # Input: PyTorch forward receives inp of shape (B, L, C) and transposes
    # to (B, C, L) for Conv1d; we keep the same (B, L, C) calling convention.
    x = jax.random.normal(k_x, (B, L, channel), jnp.float32)

    out = filter_forward(x, weight, bias, kernel_size)
    out = jax.block_until_ready(out)

    ref = _reference_forward(x, weight, bias, kernel_size)
    assert out.shape == (B, L, channel)
    assert jnp.allclose(out, ref, atol=1e-5, rtol=1e-5), "mismatch vs reference"

    print("KERNEL_OK")
</pallas_src>

<mosaic_0001>
module attributes {stable_mosaic.version = 11 : i64} {
  func.func @_filter_kernel(%arg0: i32, %arg1: memref<8x128xf32, #tpu.memory_space<vmem>>, %arg2: memref<8x25xf32, #tpu.memory_space<vmem>>, %arg3: memref<8x1xf32, #tpu.memory_space<vmem>>, %arg4: memref<8x128xf32, #tpu.memory_space<vmem>>) attributes {dimension_semantics = [#tpu.dimension_semantics<parallel>], iteration_bounds = array<i64: 1>, scalar_prefetch = 0 : i64, scratch_operands = 0 : i64, tpu.core_type = #tpu.core_type<tc>, window_params = [{transform_indices = @transform_0, window_bounds = array<i64: 8, 128>}, {transform_indices = @transform_1, window_bounds = array<i64: 8, 25>}, {transform_indices = @transform_2, window_bounds = array<i64: 8, 1>}, {transform_indices = @transform_3, window_bounds = array<i64: 8, 128>}]} {
    %c0 = arith.constant 0 : index
    %c0_0 = arith.constant 0 : index
    %0 = vector.load %arg1[%c0, %c0_0] : memref<8x128xf32, #tpu.memory_space<vmem>>, vector<8x128xf32>
    %c0_1 = arith.constant 0 : index
    %c0_2 = arith.constant 0 : index
    %1 = vector.load %arg2[%c0_1, %c0_2] : memref<8x25xf32, #tpu.memory_space<vmem>>, vector<8x25xf32>
    %c0_3 = arith.constant 0 : index
    %c0_4 = arith.constant 0 : index
    %2 = vector.load %arg3[%c0_3, %c0_4] : memref<8x1xf32, #tpu.memory_space<vmem>>, vector<8x1xf32>
    %3 = tpu.iota {dimensions = array<i32: 1>} : vector<8x128xi32>
    %4 = vector.extract_strided_slice %0 {offsets = [0, 0], sizes = [8, 1], strides = [1, 1]} : vector<8x128xf32> to vector<8x1xf32>
    %5 = vector.shape_cast %4 : vector<8x1xf32> to vector<8x1xf32>
    %6 = vector.broadcast %5 : vector<8x1xf32> to vector<8x128xf32>
    %7 = vector.extract_strided_slice %0 {offsets = [0, 15], sizes = [8, 1], strides = [1, 1]} : vector<8x128xf32> to vector<8x1xf32>
    %8 = vector.shape_cast %7 : vector<8x1xf32> to vector<8x1xf32>
    %9 = vector.broadcast %8 : vector<8x1xf32> to vector<8x128xf32>
    %10 = vector.shape_cast %2 : vector<8x1xf32> to vector<8x1xf32>
    %11 = vector.broadcast %10 : vector<8x1xf32> to vector<8x128xf32>
    %c12_i32 = arith.constant 12 : i32
    %12 = tpu.dynamic_rotate %0 by %c12_i32 dim 1 : vector<8x128xf32>, i32 -> vector<8x128xf32>
    %c12_i32_5 = arith.constant 12 : i32
    %13 = vector.broadcast %c12_i32_5 : i32 to vector<8x128xi32>
    %14 = arith.cmpi slt, %3, %13 : vector<8x128xi32>
    %15 = arith.select %14, %6, %12 : vector<8x128xi1>, vector<8x128xf32>
    %16 = vector.extract_strided_slice %1 {offsets = [0, 0], sizes = [8, 1], strides = [1, 1]} : vector<8x25xf32> to vector<8x1xf32>
    %17 = vector.broadcast %16 : vector<8x1xf32> to vector<8x128xf32>
    %18 = arith.mulf %17, %15 : vector<8x128xf32>
    %19 = arith.addf %11, %18 : vector<8x128xf32>
    %c11_i32 = arith.constant 11 : i32
    %20 = tpu.dynamic_rotate %0 by %c11_i32 dim 1 : vector<8x128xf32>, i32 -> vector<8x128xf32>
    %c11_i32_6 = arith.constant 11 : i32
    %21 = vector.broadcast %c11_i32_6 : i32 to vector<8x128xi32>
    %22 = arith.cmpi slt, %3, %21 : vector<8x128xi32>
    %23 = arith.select %22, %6, %20 : vector<8x128xi1>, vector<8x128xf32>
    %24 = vector.extract_strided_slice %1 {offsets = [0, 1], sizes = [8, 1], strides = [1, 1]} : vector<8x25xf32> to vector<8x1xf32>
    %25 = vector.broadcast %24 : vector<8x1xf32> to vector<8x128xf32>
    %26 = arith.mulf %25, %23 : vector<8x128xf32>
    %27 = arith.addf %19, %26 : vector<8x128xf32>
    %c10_i32 = arith.constant 10 : i32
    %28 = tpu.dynamic_rotate %0 by %c10_i32 dim 1 : vector<8x128xf32>, i32 -> vector<8x128xf32>
    %c10_i32_7 = arith.constant 10 : i32
    %29 = vector.broadcast %c10_i32_7 : i32 to vector<8x128xi32>
    %30 = arith.cmpi slt, %3, %29 : vector<8x128xi32>
    %31 = arith.select %30, %6, %28 : vector<8x128xi1>, vector<8x128xf32>
    %32 = vector.extract_strided_slice %1 {offsets = [0, 2], sizes = [8, 1], strides = [1, 1]} : vector<8x25xf32> to vector<8x1xf32>
    %33 = vector.broadcast %32 : vector<8x1xf32> to vector<8x128xf32>
    %34 = arith.mulf %33, %31 : vector<8x128xf32>
    %35 = arith.addf %27, %34 : vector<8x128xf32>
    %c9_i32 = arith.constant 9 : i32
    %36 = tpu.dynamic_rotate %0 by %c9_i32 dim 1 : vector<8x128xf32>, i32 -> vector<8x128xf32>
    %c9_i32_8 = arith.constant 9 : i32
    %37 = vector.broadcast %c9_i32_8 : i32 to vector<8x128xi32>
    %38 = arith.cmpi slt, %3, %37 : vector<8x128xi32>
    %39 = arith.select %38, %6, %36 : vector<8x128xi1>, vector<8x128xf32>
    %40 = vector.extract_strided_slice %1 {offsets = [0, 3], sizes = [8, 1], strides = [1, 1]} : vector<8x25xf32> to vector<8x1xf32>
    %41 = vector.broadcast %40 : vector<8x1xf32> to vector<8x128xf32>
    %42 = arith.mulf %41, %39 : vector<8x128xf32>
    %43 = arith.addf %35, %42 : vector<8x128xf32>
    %c8_i32 = arith.constant 8 : i32
    %44 = tpu.dynamic_rotate %0 by %c8_i32 dim 1 : vector<8x128xf32>, i32 -> vector<8x128xf32>
    %c8_i32_9 = arith.constant 8 : i32
    %45 = vector.broadcast %c8_i32_9 : i32 to vector<8x128xi32>
    %46 = arith.cmpi slt, %3, %45 : vector<8x128xi32>
    %47 = arith.select %46, %6, %44 : vector<8x128xi1>, vector<8x128xf32>
    %48 = vector.extract_strided_slice %1 {offsets = [0, 4], sizes = [8, 1], strides = [1, 1]} : vector<8x25xf32> to vector<8x1xf32>
    %49 = vector.broadcast %48 : vector<8x1xf32> to vector<8x128xf32>
    %50 = arith.mulf %49, %47 : vector<8x128xf32>
    %51 = arith.addf %43, %50 : vector<8x128xf32>
    %c7_i32 = arith.constant 7 : i32
    %52 = tpu.dynamic_rotate %0 by %c7_i32 dim 1 : vector<8x128xf32>, i32 -> vector<8x128xf32>
    %c7_i32_10 = arith.constant 7 : i32
    %53 = vector.broadcast %c7_i32_10 : i32 to vector<8x128xi32>
    %54 = arith.cmpi slt, %3, %53 : vector<8x128xi32>
    %55 = arith.select %54, %6, %52 : vector<8x128xi1>, vector<8x128xf32>
    %56 = vector.extract_strided_slice %1 {offsets = [0, 5], sizes = [8, 1], strides = [1, 1]} : vector<8x25xf32> to vector<8x1xf32>
    %57 = vector.broadcast %56 : vector<8x1xf32> to vector<8x128xf32>
    %58 = arith.mulf %57, %55 : vector<8x128xf32>
    %59 = arith.addf %51, %58 : vector<8x128xf32>
    %c6_i32 = arith.constant 6 : i32
    %60 = tpu.dynamic_rotate %0 by %c6_i32 dim 1 : vector<8x128xf32>, i32 -> vector<8x128xf32>
    %c6_i32_11 = arith.constant 6 : i32
    %61 = vector.broadcast %c6_i32_11 : i32 to vector<8x128xi32>
    %62 = arith.cmpi slt, %3, %61 : vector<8x128xi32>
    %63 = arith.select %62, %6, %60 : vector<8x128xi1>, vector<8x128xf32>
    %64 = vector.extract_strided_slice %1 {offsets = [0, 6], sizes = [8, 1], strides = [1, 1]} : vector<8x25xf32> to vector<8x1xf32>
    %65 = vector.broadcast %64 : vector<8x1xf32> to vector<8x128xf32>
    %66 = arith.mulf %65, %63 : vector<8x128xf32>
    %67 = arith.addf %59, %66 : vector<8x128xf32>
    %c5_i32 = arith.constant 5 : i32
    %68 = tpu.dynamic_rotate %0 by %c5_i32 dim 1 : vector<8x128xf32>, i32 -> vector<8x128xf32>
    %c5_i32_12 = arith.constant 5 : i32
    %69 = vector.broadcast %c5_i32_12 : i32 to vector<8x128xi32>
    %70 = arith.cmpi slt, %3, %69 : vector<8x128xi32>
    %71 = arith.select %70, %6, %68 : vector<8x128xi1>, vector<8x128xf32>
    %72 = vector.extract_strided_slice %1 {offsets = [0, 7], sizes = [8, 1], strides = [1, 1]} : vector<8x25xf32> to vector<8x1xf32>
    %73 = vector.broadcast %72 : vector<8x1xf32> to vector<8x128xf32>
    %74 = arith.mulf %73, %71 : vector<8x128xf32>
    %75 = arith.addf %67, %74 : vector<8x128xf32>
    %c4_i32 = arith.constant 4 : i32
    %76 = tpu.dynamic_rotate %0 by %c4_i32 dim 1 : vector<8x128xf32>, i32 -> vector<8x128xf32>
    %c4_i32_13 = arith.constant 4 : i32
    %77 = vector.broadcast %c4_i32_13 : i32 to vector<8x128xi32>
    %78 = arith.cmpi slt, %3, %77 : vector<8x128xi32>
    %79 = arith.select %78, %6, %76 : vector<8x128xi1>, vector<8x128xf32>
    %80 = vector.extract_strided_slice %1 {offsets = [0, 8], sizes = [8, 1], strides = [1, 1]} : vector<8x25xf32> to vector<8x1xf32>
    %81 = vector.broadcast %80 : vector<8x1xf32> to vector<8x128xf32>
    %82 = arith.mulf %81, %79 : vector<8x128xf32>
    %83 = arith.addf %75, %82 : vector<8x128xf32>
    %c3_i32 = arith.constant 3 : i32
    %84 = tpu.dynamic_rotate %0 by %c3_i32 dim 1 : vector<8x128xf32>, i32 -> vector<8x128xf32>
    %c3_i32_14 = arith.constant 3 : i32
    %85 = vector.broadcast %c3_i32_14 : i32 to vector<8x128xi32>
    %86 = arith.cmpi slt, %3, %85 : vector<8x128xi32>
    %87 = arith.select %86, %6, %84 : vector<8x128xi1>, vector<8x128xf32>
    %88 = vector.extract_strided_slice %1 {offsets = [0, 9], sizes = [8, 1], strides = [1, 1]} : vector<8x25xf32> to vector<8x1xf32>
    %89 = vector.broadcast %88 : vector<8x1xf32> to vector<8x128xf32>
    %90 = arith.mulf %89, %87 : vector<8x128xf32>
    %91 = arith.addf %83, %90 : vector<8x128xf32>
    %c2_i32 = arith.constant 2 : i32
    %92 = tpu.dynamic_rotate %0 by %c2_i32 dim 1 : vector<8x128xf32>, i32 -> vector<8x128xf32>
    %c2_i32_15 = arith.constant 2 : i32
    %93 = vector.broadcast %c2_i32_15 : i32 to vector<8x128xi32>
    %94 = arith.cmpi slt, %3, %93 : vector<8x128xi32>
    %95 = arith.select %94, %6, %92 : vector<8x128xi1>, vector<8x128xf32>
    %96 = vector.extract_strided_slice %1 {offsets = [0, 10], sizes = [8, 1], strides = [1, 1]} : vector<8x25xf32> to vector<8x1xf32>
    %97 = vector.broadcast %96 : vector<8x1xf32> to vector<8x128xf32>
    %98 = arith.mulf %97, %95 : vector<8x128xf32>
    %99 = arith.addf %91, %98 : vector<8x128xf32>
    %c1_i32 = arith.constant 1 : i32
    %100 = tpu.dynamic_rotate %0 by %c1_i32 dim 1 : vector<8x128xf32>, i32 -> vector<8x128xf32>
    %c1_i32_16 = arith.constant 1 : i32
    %101 = vector.broadcast %c1_i32_16 : i32 to vector<8x128xi32>
    %102 = arith.cmpi slt, %3, %101 : vector<8x128xi32>
    %103 = arith.select %102, %6, %100 : vector<8x128xi1>, vector<8x128xf32>
    %104 = vector.extract_strided_slice %1 {offsets = [0, 11], sizes = [8, 1], strides = [1, 1]} : vector<8x25xf32> to vector<8x1xf32>
    %105 = vector.broadcast %104 : vector<8x1xf32> to vector<8x128xf32>
    %106 = arith.mulf %105, %103 : vector<8x128xf32>
    %107 = arith.addf %99, %106 : vector<8x128xf32>
    %108 = vector.extract_strided_slice %1 {offsets = [0, 12], sizes = [8, 1], strides = [1, 1]} : vector<8x25xf32> to vector<8x1xf32>
    %109 = vector.broadcast %108 : vector<8x1xf32> to vector<8x128xf32>
    %110 = arith.mulf %109, %0 : vector<8x128xf32>
    %111 = arith.addf %107, %110 : vector<8x128xf32>
    %c127_i32 = arith.constant 127 : i32
    %112 = tpu.dynamic_rotate %0 by %c127_i32 dim 1 : vector<8x128xf32>, i32 -> vector<8x128xf32>
    %c15_i32 = arith.constant 15 : i32
    %113 = vector.broadcast %c15_i32 : i32 to vector<8x128xi32>
    %114 = arith.cmpi sge, %3, %113 : vector<8x128xi32>
    %115 = arith.select %114, %9, %112 : vector<8x128xi1>, vector<8x128xf32>
    %116 = vector.extract_strided_slice %1 {offsets = [0, 13], sizes = [8, 1], strides = [1, 1]} : vector<8x25xf32> to vector<8x1xf32>
    %117 = vector.broadcast %116 : vector<8x1xf32> to vector<8x128xf32>
    %118 = arith.mulf %117, %115 : vector<8x128xf32>
    %119 = arith.addf %111, %118 : vector<8x128xf32>
    %c126_i32 = arith.constant 126 : i32
    %120 = tpu.dynamic_rotate %0 by %c126_i32 dim 1 : vector<8x128xf32>, i32 -> vector<8x128xf32>
    %c14_i32 = arith.constant 14 : i32
    %121 = vector.broadcast %c14_i32 : i32 to vector<8x128xi32>
    %122 = arith.cmpi sge, %3, %121 : vector<8x128xi32>
    %123 = arith.select %122, %9, %120 : vector<8x128xi1>, vector<8x128xf32>
    %124 = vector.extract_strided_slice %1 {offsets = [0, 14], sizes = [8, 1], strides = [1, 1]} : vector<8x25xf32> to vector<8x1xf32>
    %125 = vector.broadcast %124 : vector<8x1xf32> to vector<8x128xf32>
    %126 = arith.mulf %125, %123 : vector<8x128xf32>
    %127 = arith.addf %119, %126 : vector<8x128xf32>
    %c125_i32 = arith.constant 125 : i32
    %128 = tpu.dynamic_rotate %0 by %c125_i32 dim 1 : vector<8x128xf32>, i32 -> vector<8x128xf32>
    %c13_i32 = arith.constant 13 : i32
    %129 = vector.broadcast %c13_i32 : i32 to vector<8x128xi32>
    %130 = arith.cmpi sge, %3, %129 : vector<8x128xi32>
    %131 = arith.select %130, %9, %128 : vector<8x128xi1>, vector<8x128xf32>
    %132 = vector.extract_strided_slice %1 {offsets = [0, 15], sizes = [8, 1], strides = [1, 1]} : vector<8x25xf32> to vector<8x1xf32>
    %133 = vector.broadcast %132 : vector<8x1xf32> to vector<8x128xf32>
    %134 = arith.mulf %133, %131 : vector<8x128xf32>
    %135 = arith.addf %127, %134 : vector<8x128xf32>
    %c124_i32 = arith.constant 124 : i32
    %136 = tpu.dynamic_rotate %0 by %c124_i32 dim 1 : vector<8x128xf32>, i32 -> vector<8x128xf32>
    %c12_i32_17 = arith.constant 12 : i32
    %137 = vector.broadcast %c12_i32_17 : i32 to vector<8x128xi32>
    %138 = arith.cmpi sge, %3, %137 : vector<8x128xi32>
    %139 = arith.select %138, %9, %136 : vector<8x128xi1>, vector<8x128xf32>
    %140 = vector.extract_strided_slice %1 {offsets = [0, 16], sizes = [8, 1], strides = [1, 1]} : vector<8x25xf32> to vector<8x1xf32>
    %141 = vector.broadcast %140 : vector<8x1xf32> to vector<8x128xf32>
    %142 = arith.mulf %141, %139 : vector<8x128xf32>
    %143 = arith.addf %135, %142 : vector<8x128xf32>
    %c123_i32 = arith.constant 123 : i32
    %144 = tpu.dynamic_rotate %0 by %c123_i32 dim 1 : vector<8x128xf32>, i32 -> vector<8x128xf32>
    %c11_i32_18 = arith.constant 11 : i32
    %145 = vector.broadcast %c11_i32_18 : i32 to vector<8x128xi32>
    %146 = arith.cmpi sge, %3, %145 : vector<8x128xi32>
    %147 = arith.select %146, %9, %144 : vector<8x128xi1>, vector<8x128xf32>
    %148 = vector.extract_strided_slice %1 {offsets = [0, 17], sizes = [8, 1], strides = [1, 1]} : vector<8x25xf32> to vector<8x1xf32>
    %149 = vector.broadcast %148 : vector<8x1xf32> to vector<8x128xf32>
    %150 = arith.mulf %149, %147 : vector<8x128xf32>
    %151 = arith.addf %143, %150 : vector<8x128xf32>
    %c122_i32 = arith.constant 122 : i32
    %152 = tpu.dynamic_rotate %0 by %c122_i32 dim 1 : vector<8x128xf32>, i32 -> vector<8x128xf32>
    %c10_i32_19 = arith.constant 10 : i32
    %153 = vector.broadcast %c10_i32_19 : i32 to vector<8x128xi32>
    %154 = arith.cmpi sge, %3, %153 : vector<8x128xi32>
    %155 = arith.select %154, %9, %152 : vector<8x128xi1>, vector<8x128xf32>
    %156 = vector.extract_strided_slice %1 {offsets = [0, 18], sizes = [8, 1], strides = [1, 1]} : vector<8x25xf32> to vector<8x1xf32>
    %157 = vector.broadcast %156 : vector<8x1xf32> to vector<8x128xf32>
    %158 = arith.mulf %157, %155 : vector<8x128xf32>
    %159 = arith.addf %151, %158 : vector<8x128xf32>
    %c121_i32 = arith.constant 121 : i32
    %160 = tpu.dynamic_rotate %0 by %c121_i32 dim 1 : vector<8x128xf32>, i32 -> vector<8x128xf32>
    %c9_i32_20 = arith.constant 9 : i32
    %161 = vector.broadcast %c9_i32_20 : i32 to vector<8x128xi32>
    %162 = arith.cmpi sge, %3, %161 : vector<8x128xi32>
    %163 = arith.select %162, %9, %160 : vector<8x128xi1>, vector<8x128xf32>
    %164 = vector.extract_strided_slice %1 {offsets = [0, 19], sizes = [8, 1], strides = [1, 1]} : vector<8x25xf32> to vector<8x1xf32>
    %165 = vector.broadcast %164 : vector<8x1xf32> to vector<8x128xf32>
    %166 = arith.mulf %165, %163 : vector<8x128xf32>
    %167 = arith.addf %159, %166 : vector<8x128xf32>
    %c120_i32 = arith.constant 120 : i32
    %168 = tpu.dynamic_rotate %0 by %c120_i32 dim 1 : vector<8x128xf32>, i32 -> vector<8x128xf32>
    %c8_i32_21 = arith.constant 8 : i32
    %169 = vector.broadcast %c8_i32_21 : i32 to vector<8x128xi32>
    %170 = arith.cmpi sge, %3, %169 : vector<8x128xi32>
    %171 = arith.select %170, %9, %168 : vector<8x128xi1>, vector<8x128xf32>
    %172 = vector.extract_strided_slice %1 {offsets = [0, 20], sizes = [8, 1], strides = [1, 1]} : vector<8x25xf32> to vector<8x1xf32>
    %173 = vector.broadcast %172 : vector<8x1xf32> to vector<8x128xf32>
    %174 = arith.mulf %173, %171 : vector<8x128xf32>
    %175 = arith.addf %167, %174 : vector<8x128xf32>
    %c119_i32 = arith.constant 119 : i32
    %176 = tpu.dynamic_rotate %0 by %c119_i32 dim 1 : vector<8x128xf32>, i32 -> vector<8x128xf32>
    %c7_i32_22 = arith.constant 7 : i32
    %177 = vector.broadcast %c7_i32_22 : i32 to vector<8x128xi32>
    %178 = arith.cmpi sge, %3, %177 : vector<8x128xi32>
    %179 = arith.select %178, %9, %176 : vector<8x128xi1>, vector<8x128xf32>
    %180 = vector.extract_strided_slice %1 {offsets = [0, 21], sizes = [8, 1], strides = [1, 1]} : vector<8x25xf32> to vector<8x1xf32>
    %181 = vector.broadcast %180 : vector<8x1xf32> to vector<8x128xf32>
    %182 = arith.mulf %181, %179 : vector<8x128xf32>
    %183 = arith.addf %175, %182 : vector<8x128xf32>
    %c118_i32 = arith.constant 118 : i32
    %184 = tpu.dynamic_rotate %0 by %c118_i32 dim 1 : vector<8x128xf32>, i32 -> vector<8x128xf32>
    %c6_i32_23 = arith.constant 6 : i32
    %185 = vector.broadcast %c6_i32_23 : i32 to vector<8x128xi32>
    %186 = arith.cmpi sge, %3, %185 : vector<8x128xi32>
    %187 = arith.select %186, %9, %184 : vector<8x128xi1>, vector<8x128xf32>
    %188 = vector.extract_strided_slice %1 {offsets = [0, 22], sizes = [8, 1], strides = [1, 1]} : vector<8x25xf32> to vector<8x1xf32>
    %189 = vector.broadcast %188 : vector<8x1xf32> to vector<8x128xf32>
    %190 = arith.mulf %189, %187 : vector<8x128xf32>
    %191 = arith.addf %183, %190 : vector<8x128xf32>
    %c117_i32 = arith.constant 117 : i32
    %192 = tpu.dynamic_rotate %0 by %c117_i32 dim 1 : vector<8x128xf32>, i32 -> vector<8x128xf32>
    %c5_i32_24 = arith.constant 5 : i32
    %193 = vector.broadcast %c5_i32_24 : i32 to vector<8x128xi32>
    %194 = arith.cmpi sge, %3, %193 : vector<8x128xi32>
    %195 = arith.select %194, %9, %192 : vector<8x128xi1>, vector<8x128xf32>
    %196 = vector.extract_strided_slice %1 {offsets = [0, 23], sizes = [8, 1], strides = [1, 1]} : vector<8x25xf32> to vector<8x1xf32>
    %197 = vector.broadcast %196 : vector<8x1xf32> to vector<8x128xf32>
    %198 = arith.mulf %197, %195 : vector<8x128xf32>
    %199 = arith.addf %191, %198 : vector<8x128xf32>
    %c116_i32 = arith.constant 116 : i32
    %200 = tpu.dynamic_rotate %0 by %c116_i32 dim 1 : vector<8x128xf32>, i32 -> vector<8x128xf32>
    %c4_i32_25 = arith.constant 4 : i32
    %201 = vector.broadcast %c4_i32_25 : i32 to vector<8x128xi32>
    %202 = arith.cmpi sge, %3, %201 : vector<8x128xi32>
    %203 = arith.select %202, %9, %200 : vector<8x128xi1>, vector<8x128xf32>
    %204 = vector.extract_strided_slice %1 {offsets = [0, 24], sizes = [8, 1], strides = [1, 1]} : vector<8x25xf32> to vector<8x1xf32>
    %205 = vector.broadcast %204 : vector<8x1xf32> to vector<8x128xf32>
    %206 = arith.mulf %205, %203 : vector<8x128xf32>
    %207 = arith.addf %199, %206 : vector<8x128xf32>
    %c0_26 = arith.constant 0 : index
    %c0_27 = arith.constant 0 : index
    %208 = vector.load %arg4[%c0_26, %c0_27] : memref<8x128xf32, #tpu.memory_space<vmem>>, vector<8x128xf32>
    tpu.vector_store %arg4[%c0_26, %c0_27], %207 {strides = array<i32>} : memref<8x128xf32, #tpu.memory_space<vmem>>, vector<8x128xf32>,
    return
  }
  func.func @transform_0(%arg0: i32) -> (i32, i32) {
    %c0_i32 = arith.constant 0 : i32
    %c0_i32_0 = arith.constant 0 : i32
    return %arg0, %c0_i32 : i32, i32
  }
  func.func @transform_1(%arg0: i32) -> (i32, i32) {
    %c0_i32 = arith.constant 0 : i32
    %c0_i32_0 = arith.constant 0 : i32
    return %arg0, %c0_i32 : i32, i32
  }
  func.func @transform_2(%arg0: i32) -> (i32, i32) {
    %c0_i32 = arith.constant 0 : i32
    %c0_i32_0 = arith.constant 0 : i32
    return %arg0, %c0_i32 : i32, i32
  }
  func.func @transform_3(%arg0: i32) -> (i32, i32) {
    %c0_i32 = arith.constant 0 : i32
    %c0_i32_0 = arith.constant 0 : i32
    return %arg0, %c0_i32 : i32, i32
  }
}

</mosaic_0001>

<llo_original>
// kernel: tile.18
$region0: #{tile.18}
  #allocation0 [shape = 's32[1]{0}', space=sflag, size = 0x4, scoped, tag = 'scoped memory for tile.18']
  %s0 = inlined_call_operand.vmem [shape: f32[4], index: 0, kind: input, shape index: {}]
  %s1 = inlined_call_operand.vmem [shape: f32[2,4], index: 1, kind: output, shape index: {}]
  // Predicated region
  $region2: #{tile.18} parent=0 // pred_check
    _
  $region3: #{tile.18} parent=0 // pred_check_branch
    %3 = sbr.rel (0) target = $region5
  $region4: #{tile.18} parent=0 // pred_region
    _
  $region5: #{tile.18} parent=0 // pred_fallthru
    _
  %v4 = vld [vmem:[%s0] ss:$0 sm:$0xff]
  %5 = vst [vmem:[%s1] sm:$0x3] %v4

// kernel: tile.0
$region0: #{tile.0}
  %s0 = inlined_call_operand.vmem [shape: f32[2,4], index: 0, kind: input, shape index: {}]
  %s1 = inlined_call_operand.vmem [shape: f32[8,1], index: 1, kind: output, shape index: {}]
  $region1: #{tile.0} parent=0
    #allocation0 [shape = 'u8[4096]{0}', space=vmem, size = 0x1000, scoped, tag = 'scoped mem for input reshape']
    %s3 = sshllo.u32 0, 2
    %v4 = vld [vmem:[%s0] sm:%s3]
    %5 = vst [vmem:[#allocation0] sm:%s3] %v4
    %v6 = vld [vmem:[#allocation0] sm:$0x3]
    %vm7 = vcmask 7168
    %8 = vst.msk [vmem:[%s1] ss:$4 sm:$0x3] %vm7, %v6
    %v9 = vld [vmem:[#allocation0] sm:$0x3]
    %10 = vrot.lane.b32.xlu0 %v9, 127
    %v11 = vpop.permute.xlu0 %10
    %vm12 = vcmask 7168
    %s13 = scalar_lea.vmem %s1, 1
    %14 = vst.msk [vmem:[%s13] ss:$4 sm:$0x3] %vm12, %v11
    %v15 = vld [vmem:[#allocation0] sm:$0x3]
    %16 = vrot.lane.b32.xlu0 %v15, 126
    %v17 = vpop.permute.xlu0 %16
    %vm18 = vcmask 7168
    %s19 = scalar_lea.vmem %s1, 2
    %20 = vst.msk [vmem:[%s19] ss:$4 sm:$0x3] %vm18, %v17
    %v21 = vld [vmem:[#allocation0] sm:$0x3]
    %22 = vrot.lane.b32.xlu0 %v21, 125
    %v23 = vpop.permute.xlu0 %22
    %vm24 = vcmask 7168
    %s25 = scalar_lea.vmem %s1, 3
    %26 = vst.msk [vmem:[%s25] ss:$4 sm:$0x3] %vm24, %v23

// kernel: filter_forward.1
$region0: #{filter_forward.1}
  #allocation0 [shape = 'u32[]', space=smem, size = 0x4, offset = 0x4, fixed_abs, tag = 'smem constant byte address 0x4 - core index']
  #allocation1 [shape = 'u32[144,128]{1,0:T(1,128)}', space=vmem, size = 0x12000, scoped, tag = 'internal scratch']
  %s0 = inlined_call_operand.vmem [shape: f32[8,128], index: 0, kind: input, shape index: {}]
  %s1 = inlined_call_operand.vmem [shape: f32[8,25], index: 1, kind: input, shape index: {}]
  %s2 = inlined_call_operand.vmem [shape: f32[8,1], index: 2, kind: input, shape index: {}]
  %s3 = inlined_call_operand.hbm [shape: f32[8,128], index: 3, kind: output, shape index: {}]
  %s4 = sld [smem:[#allocation0]]
  $region22: #{filter_forward.1} parent=0
    _
  %s6 = ssub.s32 1, %s4
  %s7 = scalar_select 0, %s6, %s4
  $region1: #{filter_forward.1} parent=0
    #allocation2 [shape = 'u8[4096]{0}', space=vmem, size = 0x1000, scoped, tag = 'output window, operand 0, single buffered']
    #allocation3 [shape = 's32[1]{0}', space=sflag, size = 0x4, scoped, tag = 'scoped memory for filter_forward.1']
    %8 = vsyncpa [#allocation3], 0
    // Predicated region
    $region2: #{filter_forward.1} parent=1 // pred_check
      _
    $region3: #{filter_forward.1} parent=1 // pred_check_branch
      %10 = sbr.rel (0) target = $region5
    $region4: #{filter_forward.1} parent=1 // pred_region
      _
    $region5: #{filter_forward.1} parent=1 // pred_fallthru
      _
    // Predicated region
    $region6: #{filter_forward.1} parent=1 // pred_check
      _
    $region7: #{filter_forward.1} parent=1 // pred_check_branch
      %12 = sbr.rel (0) target = $region9
    $region8: #{filter_forward.1} parent=1 // pred_region
      _
    $region9: #{filter_forward.1} parent=1 // pred_fallthru
      _
    // Predicated region
    $region10: #{filter_forward.1} parent=1 // pred_check
      _
    $region11: #{filter_forward.1} parent=1 // pred_check_branch
      %14 = sbr.rel (0) target = $region13
    $region12: #{filter_forward.1} parent=1 // pred_region
      _
    $region13: #{filter_forward.1} parent=1 // pred_fallthru
      _
    %v15 = vld [vmem:[%s0] sm:$0xff]
    %v16 = vld [vmem:[%s1] sm:$0xff]
    %v17 = vld [vmem:[%s2] sm:$0xff]
    %v18 = vlaneseq
    %v19 = vand.u32 %v18, 127
    %21 = vset.pattern.permute.xlu0 0
    %22 = vperm.xlu0 %21, %v15
    %v23 = vpop.permute.xlu0 %22
    %25 = vset.pattern.permute.xlu0 15
    %26 = vperm.xlu0 %25, %v15
    %v27 = vpop.permute.xlu0 %26
    %30 = vset.pattern.permute.xlu0 0
    %31 = vperm.xlu0 %30, %v17
    %v32 = vpop.permute.xlu0 %31
    %34 = vrot.lane.b32.xlu0 %v15, 12
    %v35 = vpop.permute.xlu0 %34
    %vm36 = vcmp.lt.s32.totalorder %v19, 12
    %v37 = vsel %vm36, %v23, %v35
    %39 = vset.pattern.permute.xlu0 0
    %40 = vperm.xlu0 %39, %v16
    %v41 = vpop.permute.xlu0 %40
    %v43 = vmul.f32 %v41, %v37
    %v44 = vadd.f32 %v32, %v43
    %45 = vrot.lane.b32.xlu0 %v15, 11
    %v46 = vpop.permute.xlu0 %45
    %vm47 = vcmp.lt.s32.totalorder %v19, 11
    %v48 = vsel %vm47, %v23, %v46
    %49 = vset.pattern.permute.xlu0 1
    %50 = vperm.xlu0 %49, %v16
    %v51 = vpop.permute.xlu0 %50
    %v53 = vmul.f32 %v51, %v48
    %v54 = vadd.f32 %v44, %v53
    %55 = vrot.lane.b32.xlu0 %v15, 10
    %v56 = vpop.permute.xlu0 %55
    %vm57 = vcmp.lt.s32.totalorder %v19, 10
    %v58 = vsel %vm57, %v23, %v56
    %59 = vset.pattern.permute.xlu0 2
    %60 = vperm.xlu0 %59, %v16
    %v61 = vpop.permute.xlu0 %60
    %v63 = vmul.f32 %v61, %v58
    %v64 = vadd.f32 %v54, %v63
    %65 = vrot.lane.b32.xlu0 %v15, 9
    %v66 = vpop.permute.xlu0 %65
    %vm67 = vcmp.lt.s32.totalorder %v19, 9
    %v68 = vsel %vm67, %v23, %v66
    %69 = vset.pattern.permute.xlu0 3
    %70 = vperm.xlu0 %69, %v16
    %v71 = vpop.permute.xlu0 %70
    %v73 = vmul.f32 %v71, %v68
    %v74 = vadd.f32 %v64, %v73
    %75 = vrot.lane.b32.xlu0 %v15, 8
    %v76 = vpop.permute.xlu0 %75
    %vm77 = vcmp.lt.s32.totalorder %v19, 8
    %v78 = vsel %vm77, %v23, %v76
    %79 = vset.pattern.permute.xlu0 4
    %80 = vperm.xlu0 %79, %v16
    %v81 = vpop.permute.xlu0 %80
    %v83 = vmul.f32 %v81, %v78
    %v84 = vadd.f32 %v74, %v83
    %85 = vrot.lane.b32.xlu0 %v15, 7
    %v86 = vpop.permute.xlu0 %85
    %vm87 = vcmp.lt.s32.totalorder %v19, 7
    %v88 = vsel %vm87, %v23, %v86
    %89 = vset.pattern.permute.xlu0 5
    %90 = vperm.xlu0 %89, %v16
    %v91 = vpop.permute.xlu0 %90
    %v93 = vmul.f32 %v91, %v88
    %v94 = vadd.f32 %v84, %v93
    %95 = vrot.lane.b32.xlu0 %v15, 6
    %v96 = vpop.permute.xlu0 %95
    %vm97 = vcmp.lt.s32.totalorder %v19, 6
    %v98 = vsel %vm97, %v23, %v96
    %99 = vset.pattern.permute.xlu0 6
    %100 = vperm.xlu0 %99, %v16
    %v101 = vpop.permute.xlu0 %100
    %v103 = vmul.f32 %v101, %v98
    %v104 = vadd.f32 %v94, %v103
    %105 = vrot.lane.b32.xlu0 %v15, 5
    %v106 = vpop.permute.xlu0 %105
    %vm107 = vcmp.lt.s32.totalorder %v19, 5
    %v108 = vsel %vm107, %v23, %v106
    %109 = vset.pattern.permute.xlu0 7
    %110 = vperm.xlu0 %109, %v16
    %v111 = vpop.permute.xlu0 %110
    %v113 = vmul.f32 %v111, %v108
    %v114 = vadd.f32 %v104, %v113
    %115 = vrot.lane.b32.xlu0 %v15, 4
    %v116 = vpop.permute.xlu0 %115
    %vm117 = vcmp.lt.s32.totalorder %v19, 4
    %v118 = vsel %vm117, %v23, %v116
    %119 = vset.pattern.permute.xlu0 8
    %120 = vperm.xlu0 %119, %v16
    %v121 = vpop.permute.xlu0 %120
    %v123 = vmul.f32 %v121, %v118
    %v124 = vadd.f32 %v114, %v123
    %125 = vrot.lane.b32.xlu0 %v15, 3
    %v126 = vpop.permute.xlu0 %125
    %vm127 = vcmp.lt.s32.totalorder %v19, 3
    %v128 = vsel %vm127, %v23, %v126
    %129 = vset.pattern.permute.xlu0 9
    %130 = vperm.xlu0 %129, %v16
    %v131 = vpop.permute.xlu0 %130
    %v133 = vmul.f32 %v131, %v128
    %v134 = vadd.f32 %v124, %v133
    %135 = vrot.lane.b32.xlu0 %v15, 2
    %v136 = vpop.permute.xlu0 %135
    %vm137 = vcmp.lt.s32.totalorder %v19, 2
    %v138 = vsel %vm137, %v23, %v136
    %139 = vset.pattern.permute.xlu0 10
    %140 = vperm.xlu0 %139, %v16
    %v141 = vpop.permute.xlu0 %140
    %v143 = vmul.f32 %v141, %v138
    %v144 = vadd.f32 %v134, %v143
    %145 = vrot.lane.b32.xlu0 %v15, 1
    %v146 = vpop.permute.xlu0 %145
    %vm147 = vcmp.lt.s32.totalorder %v19, 1
    %v148 = vsel %vm147, %v23, %v146
    %149 = vset.pattern.permute.xlu0 11
    %150 = vperm.xlu0 %149, %v16
    %v151 = vpop.permute.xlu0 %150
    %v153 = vmul.f32 %v151, %v148
    %v154 = vadd.f32 %v144, %v153
    %155 = vset.pattern.permute.xlu0 12
    %156 = vperm.xlu0 %155, %v16
    %v157 = vpop.permute.xlu0 %156
    %v159 = vmul.f32 %v157, %v15
    %v160 = vadd.f32 %v154, %v159
    %161 = vrot.lane.b32.xlu0 %v15, 127
    %v162 = vpop.permute.xlu0 %161
    %vm163 = vcmp.ge.s32.totalorder %v19, 15
    %v164 = vsel %vm163, %v27, %v162
    %165 = vset.pattern.permute.xlu0 13
    %166 = vperm.xlu0 %165, %v16
    %v167 = vpop.permute.xlu0 %166
    %v169 = vmul.f32 %v167, %v164
    %v170 = vadd.f32 %v160, %v169
    %171 = vrot.lane.b32.xlu0 %v15, 126
    %v172 = vpop.permute.xlu0 %171
    %vm173 = vcmp.ge.s32.totalorder %v19, 14
    %v174 = vsel %vm173, %v27, %v172
    %175 = vset.pattern.permute.xlu0 14
    %176 = vperm.xlu0 %175, %v16
    %v177 = vpop.permute.xlu0 %176
    %v179 = vmul.f32 %v177, %v174
    %v180 = vadd.f32 %v170, %v179
    %181 = vrot.lane.b32.xlu0 %v15, 125
    %v182 = vpop.permute.xlu0 %181
    %vm183 = vcmp.ge.s32.totalorder %v19, 13
    %v184 = vsel %vm183, %v27, %v182
    %185 = vset.pattern.permute.xlu0 15
    %186 = vperm.xlu0 %185, %v16
    %v187 = vpop.permute.xlu0 %186
    %v189 = vmul.f32 %v187, %v184
    %v190 = vadd.f32 %v180, %v189
    %191 = vrot.lane.b32.xlu0 %v15, 124
    %v192 = vpop.permute.xlu0 %191
    %vm193 = vcmp.ge.s32.totalorder %v19, 12
    %v194 = vsel %vm193, %v27, %v192
    %195 = vset.pattern.permute.xlu0 16
    %196 = vperm.xlu0 %195, %v16
    %v197 = vpop.permute.xlu0 %196
    %v199 = vmul.f32 %v197, %v194
    %v200 = vadd.f32 %v190, %v199
    %201 = vrot.lane.b32.xlu0 %v15, 123
    %v202 = vpop.permute.xlu0 %201
    %vm203 = vcmp.ge.s32.totalorder %v19, 11
    %v204 = vsel %vm203, %v27, %v202
    %205 = vset.pattern.permute.xlu0 17
    %206 = vperm.xlu0 %205, %v16
    %v207 = vpop.permute.xlu0 %206
    %v209 = vmul.f32 %v207, %v204
    %v210 = vadd.f32 %v200, %v209
    %211 = vrot.lane.b32.xlu0 %v15, 122
    %v212 = vpop.permute.xlu0 %211
    %vm213 = vcmp.ge.s32.totalorder %v19, 10
    %v214 = vsel %vm213, %v27, %v212
    %215 = vset.pattern.permute.xlu0 18
    %216 = vperm.xlu0 %215, %v16
    %v217 = vpop.permute.xlu0 %216
    %v219 = vmul.f32 %v217, %v214
    %v220 = vadd.f32 %v210, %v219
    %221 = vrot.lane.b32.xlu0 %v15, 121
    %v222 = vpop.permute.xlu0 %221
    %vm223 = vcmp.ge.s32.totalorder %v19, 9
    %v224 = vsel %vm223, %v27, %v222
    %225 = vset.pattern.permute.xlu0 19
    %226 = vperm.xlu0 %225, %v16
    %v227 = vpop.permute.xlu0 %226
    %v229 = vmul.f32 %v227, %v224
    %v230 = vadd.f32 %v220, %v229
    %231 = vrot.lane.b32.xlu0 %v15, 120
    %v232 = vpop.permute.xlu0 %231
    %vm233 = vcmp.ge.s32.totalorder %v19, 8
    %v234 = vsel %vm233, %v27, %v232
    %235 = vset.pattern.permute.xlu0 20
    %236 = vperm.xlu0 %235, %v16
    %v237 = vpop.permute.xlu0 %236
    %v239 = vmul.f32 %v237, %v234
    %v240 = vadd.f32 %v230, %v239
    %241 = vrot.lane.b32.xlu0 %v15, 119
    %v242 = vpop.permute.xlu0 %241
    %vm243 = vcmp.ge.s32.totalorder %v19, 7
    %v244 = vsel %vm243, %v27, %v242
    %245 = vset.pattern.permute.xlu0 21
    %246 = vperm.xlu0 %245, %v16
    %v247 = vpop.permute.xlu0 %246
    %v249 = vmul.f32 %v247, %v244
    %v250 = vadd.f32 %v240, %v249
    %251 = vrot.lane.b32.xlu0 %v15, 118
    %v252 = vpop.permute.xlu0 %251
    %vm253 = vcmp.ge.s32.totalorder %v19, 6
    %v254 = vsel %vm253, %v27, %v252
    %255 = vset.pattern.permute.xlu0 22
    %256 = vperm.xlu0 %255, %v16
    %v257 = vpop.permute.xlu0 %256
    %v259 = vmul.f32 %v257, %v254
    %v260 = vadd.f32 %v250, %v259
    %261 = vrot.lane.b32.xlu0 %v15, 117
    %v262 = vpop.permute.xlu0 %261
    %vm263 = vcmp.ge.s32.totalorder %v19, 5
    %v264 = vsel %vm263, %v27, %v262
    %265 = vset.pattern.permute.xlu0 23
    %266 = vperm.xlu0 %265, %v16
    %v267 = vpop.permute.xlu0 %266
    %v269 = vmul.f32 %v267, %v264
    %v270 = vadd.f32 %v260, %v269
    %271 = vrot.lane.b32.xlu0 %v15, 116
    %v272 = vpop.permute.xlu0 %271
    %vm273 = vcmp.ge.s32.totalorder %v19, 4
    %v274 = vsel %vm273, %v27, %v272
    %275 = vset.pattern.permute.xlu0 24
    %276 = vperm.xlu0 %275, %v16
    %v277 = vpop.permute.xlu0 %276
    %v279 = vmul.f32 %v277, %v274
    %v280 = vadd.f32 %v270, %v279
    %281 = vst [vmem:[#allocation2] sm:$0xff] %v280
    // Predicated region
    $region14: #{filter_forward.1} parent=1 // pred_check
      _
    $region15: #{filter_forward.1} parent=1 // pred_check_branch
      %283 = sbr.rel (0) target = $region17
    $region16: #{filter_forward.1} parent=1 // pred_region
      %s285 = ssub.s32 128, 128
      %286 = vsyncadd [#allocation3], %s285
      %s288 = sshll.u32 [#allocation2], 4
      %s289 = int_to_ptr.vmem [resolvable:$true] %s288
      %291 = dma.vmem_to_hbm [thread:$0]  %s289, 128, %s3, [#allocation3]
    $region17: #{filter_forward.1} parent=1 // pred_fallthru
      _
    // Predicated region
    $region18: #{filter_forward.1} parent=1 // pred_check
      _
    $region19: #{filter_forward.1} parent=1 // pred_check_branch
      %293 = sbr.rel (0) target = $region21
    $region20: #{filter_forward.1} parent=1 // pred_region
      %294 = dma.done [#allocation3], 128
    $region21: #{filter_forward.1} parent=1 // pred_fallthru
      _
    %295 = vsyncpa [#allocation3], 1

</llo_original>
